<compile_context>
chip_gen: v6e
topology: v6e:2x2x1
jax: 0.10.0
libtpu: 0.0.40
codegen_flags: <defaults>
</compile_context>

<pallas_src>
import functools

import jax
import jax.numpy as jnp
from jax.experimental import pallas as pl
from jax.experimental.pallas import tpu as pltpu


def _mosaic_params(dimension_semantics, est_block_bytes):
    """CompilerParams with a VMEM limit sized from the double-buffered blocks."""
    need = 2 * int(est_block_bytes) + (2 << 20)
    vmem = None if need <= (32 << 20) else int(min(need, 64 << 20))  # v7x cap
    return pltpu.CompilerParams(dimension_semantics=dimension_semantics,
                                vmem_limit_bytes=vmem)


# ----------------------------------------------------------------------------
# Kernel 1: row-tiled linear projection  o = x @ W.T   (nn.Linear, bias=False)
# ----------------------------------------------------------------------------
def _linear_kernel(x_ref, w_ref, o_ref):
    x = x_ref[...].astype(jnp.bfloat16)
    w = w_ref[...].astype(jnp.bfloat16)
    # contract last dims of both operands == x @ W.T with no XLU transpose
    o_ref[...] = jax.lax.dot_general(x, w, (((1,), (1,)), ((), ())),
                                     preferred_element_type=jnp.float32)


def linear(x2d, w, *, row_block=256):
    M, K = x2d.shape
    O, K2 = w.shape
    assert K == K2
    tm = M if M <= row_block else row_block
    grid = (pl.cdiv(M, tm),)
    est = 4 * (tm * K + O * K + tm * O)
    return pl.pallas_call(
        _linear_kernel,
        out_shape=jax.ShapeDtypeStruct((M, O), jnp.float32),
        grid=grid,
        in_specs=[pl.BlockSpec((tm, K), lambda i: (i, 0)),
                  pl.BlockSpec((O, K), lambda i: (0, 0))],   # weight resident
        out_specs=pl.BlockSpec((tm, O), lambda i: (i, 0)),
        compiler_params=_mosaic_params(("parallel",), est),
    )(x2d, w)


# ----------------------------------------------------------------------------
# Kernel 2: head-packed rotary + scaled dot-product attention.
#   grid = (batch, q-tiles); every head of the block is handled per step with
#   2-D bf16 matmuls (f32 accumulation).  q/k/v arrive in (B, L, H, d) layout
#   (a free reshape of the projection output); the context is written
#   lane-dense as (B, L, H*d_v).
# ----------------------------------------------------------------------------
def _attention_kernel(q_ref, k_ref, v_ref, cosq_ref, sinq_ref, cosk_ref,
                      sink_ref, mask_ref, o_ref, attn_ref, *, n_head, scale):
    q3 = q_ref[0]                            # (tq, H, d_k)
    k3 = k_ref[0]                            # (Lk, H, d_k)
    v3 = v_ref[0]                            # (Lk, H, d_v)
    cq, sq = cosq_ref[...], sinq_ref[...]    # (tq, d_k)
    ck, sk = cosk_ref[...], sink_ref[...]    # (Lk, d_k)
    m = mask_ref[0, 0]                       # (Lk,)

    def rope(t, cos, sin_signed):
        # rotate_half with the sign folded into the precomputed signed sin.
        half = t.shape[-1] // 2
        rot = jnp.concatenate([t[:, half:], t[:, :half]], axis=-1)
        return t * cos + rot * sin_signed

    ctx_parts = []
    for h in range(n_head):                  # static unroll over packed heads
        qh = rope(q3[:, h, :], cq, sq).astype(jnp.bfloat16)
        kh = rope(k3[:, h, :], ck, sk).astype(jnp.bfloat16)
        vh = v3[:, h, :].astype(jnp.bfloat16)

        s = jax.lax.dot_general(qh, kh, (((1,), (1,)), ((), ())),
                                preferred_element_type=jnp.float32)
        s = s * jnp.float32(scale)
        s = jnp.where(m[None, :] == 0, jnp.float32(-1e9), s)

        smax = jnp.max(s, axis=-1, keepdims=True)
        p = jnp.exp(s - smax)
        denom = jnp.sum(p, axis=-1, keepdims=True)
        attn = p * pl.reciprocal(denom, approx=True)
        # attention dropout: identity at inference time
        attn_ref[0, h] = attn.astype(attn_ref.dtype)

        ctx_parts.append(jax.lax.dot_general(attn.astype(jnp.bfloat16), vh,
                                             (((1,), (0,)), ((), ())),
                                             preferred_element_type=jnp.float32))

    # single lane-dense (tq, H*d_v) store
    o_ref[0] = jnp.concatenate(ctx_parts, axis=-1).astype(o_ref.dtype)


def attention(qp, kp, vp, cos, sin_signed, mask, *, attn_dtype=jnp.float32,
              q_block=128):
    B, Lq, H, d_k = qp.shape
    Lk = kp.shape[1]
    d_v = vp.shape[-1]
    tq = Lq if Lq <= q_block else q_block
    nq = pl.cdiv(Lq, tq)
    scale = 1.0 / (d_k ** 0.5)

    kernel = functools.partial(_attention_kernel, n_head=H, scale=scale)
    est = 4 * (tq * H * d_k + Lk * H * (d_k + d_v) + 2 * tq * d_k
               + 2 * Lk * d_k + Lk + tq * H * d_v + H * tq * Lk)

    # TODO(synk): when the attention-probs output is not required (or L is very
    # long), switch to a kv-tiled flash loop with online-softmax VMEM
    # accumulators so the (L, L) buffer never materializes; kept exact here
    # because the module returns `attn`.
    return pl.pallas_call(
        kernel,
        out_shape=(jax.ShapeDtypeStruct((B, Lq, H * d_v), jnp.float32),
                   jax.ShapeDtypeStruct((B, H, Lq, Lk), attn_dtype)),
        grid_spec=pltpu.PrefetchScalarGridSpec(
            num_scalar_prefetch=0,
            grid=(B, nq),
            in_specs=[
                pl.BlockSpec((1, tq, H, d_k), lambda b, qi: (b, qi, 0, 0)),
                pl.BlockSpec((1, Lk, H, d_k), lambda b, qi: (b, 0, 0, 0)),
                pl.BlockSpec((1, Lk, H, d_v), lambda b, qi: (b, 0, 0, 0)),
                pl.BlockSpec((tq, d_k), lambda b, qi: (qi, 0)),    # cos (q rows)
                pl.BlockSpec((tq, d_k), lambda b, qi: (qi, 0)),    # sin* (q rows)
                pl.BlockSpec((Lk, d_k), lambda b, qi: (0, 0)),     # cos (k rows)
                pl.BlockSpec((Lk, d_k), lambda b, qi: (0, 0)),     # sin* (k rows)
                pl.BlockSpec((1, 1, Lk), lambda b, qi: (b, 0, 0)),  # padding mask
            ],
            out_specs=[
                pl.BlockSpec((1, tq, H * d_v), lambda b, qi: (b, qi, 0)),
                pl.BlockSpec((1, H, tq, Lk), lambda b, qi: (b, 0, qi, 0)),
            ],
        ),
        compiler_params=_mosaic_params(("parallel", "parallel"), est),
    )(qp, kp, vp, cos, sin_signed, cos, sin_signed, mask.reshape(B, 1, Lk))


# ----------------------------------------------------------------------------
# Kernel 3: row-tiled fused output projection + residual + LayerNorm (eps=1e-6)
# ----------------------------------------------------------------------------
def _fc_residual_ln_kernel(x_ref, w_ref, res_ref, g_ref, b_ref, o_ref):
    x = x_ref[...].astype(jnp.bfloat16)
    w = w_ref[...].astype(jnp.bfloat16)
    y = jax.lax.dot_general(x, w, (((1,), (1,)), ((), ())),
                            preferred_element_type=jnp.float32)
    # output dropout: identity at inference time
    y = y + res_ref[...]
    mean = jnp.mean(y, axis=-1, keepdims=True)
    c = y - mean
    var = jnp.mean(c * c, axis=-1, keepdims=True)
    inv = jax.lax.rsqrt(var + jnp.float32(1e-6))
    o_ref[...] = (c * inv) * g_ref[...] + b_ref[...]


def fc_residual_ln(x2d, w_fc, res2d, gamma, beta, *, row_block=256):
    M, K = x2d.shape
    D = w_fc.shape[0]
    tm = M if M <= row_block else row_block
    grid = (pl.cdiv(M, tm),)
    est = 4 * (tm * K + D * K + 2 * tm * D + 2 * D)
    return pl.pallas_call(
        _fc_residual_ln_kernel,
        out_shape=jax.ShapeDtypeStruct((M, D), jnp.float32),
        grid=grid,
        in_specs=[pl.BlockSpec((tm, K), lambda i: (i, 0)),
                  pl.BlockSpec((D, K), lambda i: (0, 0)),     # weight resident
                  pl.BlockSpec((tm, D), lambda i: (i, 0)),
                  pl.BlockSpec((1, D), lambda i: (0, 0)),
                  pl.BlockSpec((1, D), lambda i: (0, 0))],
        out_specs=pl.BlockSpec((tm, D), lambda i: (i, 0)),
        compiler_params=_mosaic_params(("parallel",), est),
    )(x2d, w_fc, res2d, gamma, beta)


# ----------------------------------------------------------------------------
# Full forward (wrapper does only free reshapes -- no HBM transposes)
# ----------------------------------------------------------------------------
def multi_head_attention(q, k, v, params, mask, freqs, n_head, d_k, d_v,
                         attn_dtype=jnp.float32):
    B, Lq, d_model = q.shape
    Lk = k.shape[1]
    residual = q

    # Q/K/V projections (row-tiled, pipelined).  NOTE: fusing the three
    # projections into one call is only valid when q, k, v alias
    # (self-attention); the module signature takes distinct tensors.
    qp = linear(q.reshape(B * Lq, d_model), params["w_qs"]).reshape(B, Lq, n_head, d_k)
    kp = linear(k.reshape(B * Lk, d_model), params["w_ks"]).reshape(B, Lk, n_head, d_k)
    vp = linear(v.reshape(B * Lk, d_model), params["w_vs"]).reshape(B, Lk, n_head, d_v)

    # rotary tables: rot_dim == d_k, scale == 1 (apply_rotary_pos_emb with a
    # (L, d_k) freqs table and len_q == len_k == L)
    cos = jnp.cos(freqs).astype(jnp.float32)                     # (L, d_k)
    sin = jnp.sin(freqs).astype(jnp.float32)
    half = d_k // 2
    sin_signed = jnp.concatenate([-sin[:, :half], sin[:, half:]], axis=-1)

    ctx, attn = attention(qp, kp, vp, cos, sin_signed, mask,
                          attn_dtype=attn_dtype)                 # ctx: (B, Lq, H*d_v)

    y = fc_residual_ln(ctx.reshape(B * Lq, n_head * d_v), params["fc"],
                       residual.reshape(B * Lq, d_model),
                       params["ln_gamma"].reshape(1, d_model),
                       params["ln_beta"].reshape(1, d_model))
    return y.reshape(B, Lq, d_model), attn


# ----------------------------------------------------------------------------
# Pure-JAX reference (mirrors the PyTorch module) for a correctness check
# ----------------------------------------------------------------------------
def reference(q, k, v, params, mask, freqs, n_head, d_k, d_v):
    B, Lq, d_model = q.shape
    Lk = k.shape[1]
    residual = q
    qp = (q @ params["w_qs"].T).reshape(B, Lq, n_head, d_k).transpose(0, 2, 1, 3)
    kp = (k @ params["w_ks"].T).reshape(B, Lk, n_head, d_k).transpose(0, 2, 1, 3)
    vp = (v @ params["w_vs"].T).reshape(B, Lk, n_head, d_v).transpose(0, 2, 1, 3)

    def rope(t):
        half = t.shape[-1] // 2
        rot = jnp.concatenate([-t[..., half:], t[..., :half]], axis=-1)
        return t * jnp.cos(freqs) + rot * jnp.sin(freqs)

    qp, kp = rope(qp), rope(kp)
    scores = jnp.einsum("bhqd,bhkd->bhqk", qp / (d_k ** 0.5), kp)
    scores = jnp.where(mask[:, None, None, :] == 0, -1e9, scores)
    attn = jax.nn.softmax(scores, axis=-1)
    out = jnp.einsum("bhqk,bhkd->bhqd", attn, vp)
    out = out.transpose(0, 2, 1, 3).reshape(B, Lq, n_head * d_v)
    y = out @ params["fc"].T + residual
    mean = jnp.mean(y, axis=-1, keepdims=True)
    var = jnp.mean((y - mean) ** 2, axis=-1, keepdims=True)
    y = (y - mean) * jax.lax.rsqrt(var + 1e-6) * params["ln_gamma"] + params["ln_beta"]
    return y, attn


if __name__ == "__main__":
    # small shapes consistent with the module
    B, L, d_model = 2, 8, 32
    n_head, d_k, d_v = 4, 8, 8

    key = jax.random.PRNGKey(0)
    keys = jax.random.split(key, 10)
    params = {
        "w_qs": 0.05 * jax.random.normal(keys[0], (n_head * d_k, d_model), jnp.float32),
        "w_ks": 0.05 * jax.random.normal(keys[1], (n_head * d_k, d_model), jnp.float32),
        "w_vs": 0.05 * jax.random.normal(keys[2], (n_head * d_v, d_model), jnp.float32),
        "fc":   0.05 * jax.random.normal(keys[3], (d_model, n_head * d_v), jnp.float32),
        "ln_gamma": 1.0 + 0.01 * jax.random.normal(keys[4], (d_model,), jnp.float32),
        "ln_beta":  0.01 * jax.random.normal(keys[5], (d_model,), jnp.float32),
    }

    q = jax.random.normal(keys[6], (B, L, d_model), jnp.float32)
    k = jax.random.normal(keys[7], (B, L, d_model), jnp.float32)
    v = jax.random.normal(keys[8], (B, L, d_model), jnp.float32)

    # padding-style mask (B, L_k): zero = masked
    mask = jnp.ones((B, L), jnp.int32).at[0, -1].set(0).at[1, -2:].set(0)

    # rotary frequencies (L, d_k)
    inv_freq = 1.0 / (10000.0 ** (jnp.arange(d_k // 2, dtype=jnp.float32) / (d_k // 2)))
    inv_freq = jnp.concatenate([inv_freq, inv_freq])                        # (d_k,)
    freqs = jnp.arange(L, dtype=jnp.float32)[:, None] * inv_freq[None, :]   # (L, d_k)

    out, attn = multi_head_attention(q, k, v, params, mask, freqs, n_head, d_k, d_v)
    out = jax.block_until_ready(out)
    attn = jax.block_until_ready(attn)

    ref_out, ref_attn = reference(q, k, v, params, mask, freqs, n_head, d_k, d_v)
    assert out.shape == (B, L, d_model) and attn.shape == (B, n_head, L, L)
    assert jnp.allclose(out, ref_out, atol=1e-2, rtol=1e-2)
    assert jnp.allclose(attn, ref_attn, atol=1e-2, rtol=1e-2)

    print("KERNEL_OK")
</pallas_src>

<mosaic_0001>
module attributes {stable_mosaic.version = 11 : i64} {
  func.func @_linear_kernel(%arg0: i32, %arg1: memref<16x32xf32, #tpu.memory_space<vmem>>, %arg2: memref<32x32xf32, #tpu.memory_space<vmem>>, %arg3: memref<16x32xf32, #tpu.memory_space<vmem>>) attributes {dimension_semantics = [#tpu.dimension_semantics<parallel>], iteration_bounds = array<i64: 1>, scalar_prefetch = 0 : i64, scratch_operands = 0 : i64, tpu.core_type = #tpu.core_type<tc>, window_params = [{transform_indices = @transform_0, window_bounds = array<i64: 16, 32>}, {pipeline_mode = #tpu.pipeline_mode<synchronous>, transform_indices = @transform_1, window_bounds = array<i64: 32, 32>}, {transform_indices = @transform_2, window_bounds = array<i64: 16, 32>}]} {
    %c0 = arith.constant 0 : index
    %c0_0 = arith.constant 0 : index
    %0 = vector.load %arg1[%c0, %c0_0] : memref<16x32xf32, #tpu.memory_space<vmem>>, vector<16x32xf32>
    %1 = arith.truncf %0 : vector<16x32xf32> to vector<16x32xbf16>
    %c0_1 = arith.constant 0 : index
    %c0_2 = arith.constant 0 : index
    %2 = vector.load %arg2[%c0_1, %c0_2] : memref<32x32xf32, #tpu.memory_space<vmem>>, vector<32x32xf32>
    %3 = arith.truncf %2 : vector<32x32xf32> to vector<32x32xbf16>
    %cst = arith.constant dense<0.000000e+00> : vector<16x32xf32>
    %4 = tpu.matmul %1, %3, %cst {dimension_numbers = #tpu.dot_dimension_numbers<[1], [1], [0], [0], [0, 0, 1, 0], [], []>} : vector<16x32xbf16>, vector<32x32xbf16>, vector<16x32xf32> -> vector<16x32xf32>
    %c0_3 = arith.constant 0 : index
    %c0_4 = arith.constant 0 : index
    %5 = vector.load %arg3[%c0_3, %c0_4] : memref<16x32xf32, #tpu.memory_space<vmem>>, vector<16x32xf32>
    tpu.vector_store %arg3[%c0_3, %c0_4], %4 {strides = array<i32>} : memref<16x32xf32, #tpu.memory_space<vmem>>, vector<16x32xf32>,
    return
  }
  func.func @transform_0(%arg0: i32) -> (i32, i32) {
    %c0_i32 = arith.constant 0 : i32
    %c0_i32_0 = arith.constant 0 : i32
    return %arg0, %c0_i32 : i32, i32
  }
  func.func @transform_1(%arg0: i32) -> (i32, i32) {
    %c0_i32 = arith.constant 0 : i32
    %c0_i32_0 = arith.constant 0 : i32
    %c0_i32_1 = arith.constant 0 : i32
    return %c0_i32, %c0_i32_0 : i32, i32
  }
  func.func @transform_2(%arg0: i32) -> (i32, i32) {
    %c0_i32 = arith.constant 0 : i32
    %c0_i32_0 = arith.constant 0 : i32
    return %arg0, %c0_i32 : i32, i32
  }
}

</mosaic_0001>

<llo_original>
// kernel: tpu_custom_call.1
$region0: #{tpu_custom_call.1}
  #allocation0 [shape = 'u32[]', space=smem, size = 0x4, offset = 0x4, fixed_abs, tag = 'smem constant byte address 0x4 - core index']
  #allocation1 [shape = 'u32[144,128]{1,0:T(1,128)}', space=vmem, size = 0x12000, scoped, tag = 'internal scratch']
  %s0 = inlined_call_operand.hbm [shape: f32[16,32], index: 0, kind: input, shape index: {}]
  %s1 = inlined_call_operand.hbm [shape: f32[32,32], index: 1, kind: input, shape index: {}]
  %s2 = inlined_call_operand.hbm [shape: f32[16,32], index: 2, kind: output, shape index: {}]
  %s3 = sld [smem:[#allocation0]]
  $region26: #{tpu_custom_call.1} parent=0
    _
  %s5 = ssub.s32 1, %s3
  %s6 = scalar_select 0, %s5, %s3
  $region1: #{tpu_custom_call.1} parent=0
    #allocation2 [shape = 'u8[8192]{0}', space=vmem, size = 0x2000, scoped, tag = 'input window, operand 0, single buffered']
    #allocation3 [shape = 's32[1]{0}', space=sflag, size = 0x4, scoped, tag = 'scoped memory for tpu_custom_call.1']
    #allocation4 [shape = 's32[1]{0}', space=sflag, size = 0x4, scoped, tag = 'scoped memory for tpu_custom_call.1']
    #allocation5 [shape = 'u8[16384]{0}', space=vmem, size = 0x4000, scoped, tag = 'input window, operand 1, single buffered']
    #allocation6 [shape = 's32[1]{0}', space=sflag, size = 0x4, scoped, tag = 'scoped memory for tpu_custom_call.1']
    #allocation7 [shape = 'u8[8192]{0}', space=vmem, size = 0x2000, scoped, tag = 'output window, operand 0, single buffered']
    %7 = vsyncpa [#allocation3], 0
    %8 = vsyncpa [#allocation6], 0
    %9 = vsyncpa [#allocation4], 0
    // Predicated region
    $region2: #{tpu_custom_call.1} parent=1 // pred_check
      _
    $region3: #{tpu_custom_call.1} parent=1 // pred_check_branch
      %11 = sbr.rel (0) target = $region5
    $region4: #{tpu_custom_call.1} parent=1 // pred_region
      %s13 = ssub.s32 256, 256
      %14 = vsyncadd [#allocation3], %s13
      %s15 = sshll.u32 [#allocation2], 4
      %s16 = int_to_ptr.vmem [resolvable:$true] %s15
      %21 = dma.hbm_to_vmem [thread:$0]  %s0, 256, %s16, [#allocation3], 128, 128, 8
    $region5: #{tpu_custom_call.1} parent=1 // pred_fallthru
      _
    // Predicated region
    $region6: #{tpu_custom_call.1} parent=1 // pred_check
      _
    $region7: #{tpu_custom_call.1} parent=1 // pred_check_branch
      %23 = sbr.rel (0) target = $region9
    $region8: #{tpu_custom_call.1} parent=1 // pred_region
      %s25 = ssub.s32 512, 512
      %26 = vsyncadd [#allocation6], %s25
      %s27 = sshll.u32 [#allocation5], 4
      %s28 = int_to_ptr.vmem [resolvable:$true] %s27
      %33 = dma.hbm_to_vmem [thread:$0]  %s1, 512, %s28, [#allocation6], 128, 128, 8
    $region9: #{tpu_custom_call.1} parent=1 // pred_fallthru
      _
    // Predicated region
    $region10: #{tpu_custom_call.1} parent=1 // pred_check
      _
    $region11: #{tpu_custom_call.1} parent=1 // pred_check_branch
      %35 = sbr.rel (0) target = $region13
    $region12: #{tpu_custom_call.1} parent=1 // pred_region
      %36 = dma.done [#allocation3], 256
    $region13: #{tpu_custom_call.1} parent=1 // pred_fallthru
      _
    // Predicated region
    $region14: #{tpu_custom_call.1} parent=1 // pred_check
      _
    $region15: #{tpu_custom_call.1} parent=1 // pred_check_branch
      %38 = sbr.rel (0) target = $region17
    $region16: #{tpu_custom_call.1} parent=1 // pred_region
      %39 = dma.done [#allocation6], 512
    $region17: #{tpu_custom_call.1} parent=1 // pred_fallthru
      _
    %v41 = vld [vmem:[#allocation2] sm:$0xff]
    %v42 = vld [vmem:[#allocation2 + $0x8] sm:$0xff]
    %v43 = vpack.c.bf16 %v42, %v41
    %v44 = vld [vmem:[#allocation5] sm:$0xff]
    %v45 = vld [vmem:[#allocation5 + $0x8] sm:$0xff]
    %v46 = vld [vmem:[#allocation5 + $0x10] sm:$0xff]
    %v47 = vld [vmem:[#allocation5 + $0x18] sm:$0xff]
    %v48 = vpack.c.bf16 %v45, %v44
    %v49 = vpack.c.bf16 %v47, %v46
    %vm50 = vcmask 261120
    %v52 = vsel %vm50, %v43, 0
    %v55 = vsel %vm50, %v48, 0
    %v58 = vsel %vm50, %v49, 0
    %60 = vmatprep.subr.bf16.mxu0 0
    %61 = vmatpush1.bf16.xpose.msra.mxu0 0
    %62 = vmatprep.subr.bf16.mxu0 0
    %63 = vmatpush1.bf16.xpose.msra.mxu0 0
    %64 = vmatprep.subr.bf16.mxu0 0
    %65 = vmatpush1.bf16.xpose.msra.mxu0 0
    %66 = vmatprep.subr.bf16.mxu0 0
    %67 = vmatpush1.bf16.xpose.msra.mxu0 0
    %68 = vmatprep.subr.bf16.mxu0 0
    %69 = vmatpush1.bf16.xpose.msra.mxu0 0
    %70 = vmatprep.subr.bf16.mxu0 0
    %71 = vmatpush1.bf16.xpose.msra.mxu0 0
    %72 = vmatprep.subr.bf16.mxu0 0
    %73 = vmatpush1.bf16.xpose.msra.mxu0 %v58
    %74 = vmatprep.subr.bf16.mxu0 0
    %75 = vmatpush1.bf16.xpose.msra.mxu0 %v55
    %76 = vmatprep.subr.bf16.mxu0 0
    %77 = vmatpush2.bf16.xpose.msra.mxu0 0
    %78 = vmatprep.subr.bf16.mxu0 0
    %79 = vmatpush2.bf16.xpose.msra.mxu0 0
    %80 = vmatprep.subr.bf16.mxu0 0
    %81 = vmatpush2.bf16.xpose.msra.mxu0 0
    %82 = vmatprep.subr.bf16.mxu0 0
    %83 = vmatpush2.bf16.xpose.msra.mxu0 0
    %84 = vmatprep.subr.bf16.mxu0 0
    %85 = vmatpush2.bf16.xpose.msra.mxu0 0
    %86 = vmatprep.subr.bf16.mxu0 0
    %87 = vmatpush2.bf16.xpose.msra.mxu0 0
    %88 = vmatprep.subr.bf16.mxu0 0
    %89 = vmatpush2.bf16.xpose.msra.mxu0 0
    %90 = vmatprep.subr.bf16.mxu0 0
    %91 = vmatpush2.bf16.xpose.msra.mxu0 0
    %92 = vmatprep.mubr.bf16.mxu0 0
    %93 = vmatmul.mubr.bf16.gmra.mxu0 %v52
    %v94 = vpop.f32.mrf.mxu0
    %v95 = vadd.f32 0.0, %v94
    %v96 = vpop.f32.mrf.mxu0
    %v97 = vpop.f32.mrf.mxu0
    %v98 = vadd.f32 0.0, %v97
    %v99 = vpop.f32.mrf.mxu0
    %100 = vdwg.mxu0
    %101 = vst.msk [vmem:[#allocation7] sm:$0xff] %vm50, %v95
    %102 = vst.msk [vmem:[#allocation7 + $0x8] sm:$0xff] %vm50, %v98
    // Predicated region
    $region18: #{tpu_custom_call.1} parent=1 // pred_check
      _
    $region19: #{tpu_custom_call.1} parent=1 // pred_check_branch
      %104 = sbr.rel (0) target = $region21
    $region20: #{tpu_custom_call.1} parent=1 // pred_region
      %s106 = ssub.s32 256, 256
      %107 = vsyncadd [#allocation4], %s106
      %s108 = sshll.u32 [#allocation7], 4
      %s109 = int_to_ptr.vmem [resolvable:$true] %s108
      %114 = dma.vmem_to_hbm [thread:$0]  %s109, 256, %s2, [#allocation4], 128, 128, 8
    $region21: #{tpu_custom_call.1} parent=1 // pred_fallthru
      _
    // Predicated region
    $region22: #{tpu_custom_call.1} parent=1 // pred_check
      _
    $region23: #{tpu_custom_call.1} parent=1 // pred_check_branch
      %116 = sbr.rel (0) target = $region25
    $region24: #{tpu_custom_call.1} parent=1 // pred_region
      %117 = dma.done [#allocation4], 256
    $region25: #{tpu_custom_call.1} parent=1 // pred_fallthru
      _
    %118 = vsyncpa [#allocation3], 1
    %119 = vsyncpa [#allocation6], 1
    %120 = vsyncpa [#allocation4], 1

</llo_original>
